<compile_context>
chip_gen: v6e
topology: v6e:2x2x1
jax: 0.10.0
libtpu: 0.0.40
codegen_flags: <defaults>
</compile_context>

<pallas_src>
import math

import jax
import jax.numpy as jnp
from jax import lax
from jax.experimental import pallas as pl
from jax.experimental.pallas import tpu as pltpu


def _make_kernel(D, G, P, N, L):
    """Kernel specialized (at trace time) on the folded layout (G, P, N, L)."""
    neg_c = -(math.log(1000.0) / D)   # phase[d] = 100 * exp(-(2*(d//2)) * ln(1000)/D)

    def kernel(x_ref, t_ref, o_ref, phase_ref, off_ref):
        # Build the per-row constants once per core (first step of the
        # "arbitrary" inner axis), into persistent VMEM scratch.
        @pl.when(pl.program_id(1) == 0)
        def _init():
            g = lax.broadcasted_iota(jnp.int32, (G, L), 0)
            if P > 1:
                # p = lane // N computed with P-1 thresholded compares
                # (pure VPU ops; avoids vector integer division).
                lane = lax.broadcasted_iota(jnp.int32, (G, L), 1)
                p = jnp.zeros((G, L), jnp.int32)
                for k in range(1, P):
                    p = p + (lane >= k * N).astype(jnp.int32)
                d = g * P + p
            else:
                d = g
            parity = jnp.bitwise_and(d, 1)                 # 1 on cos rows
            even = (d - parity).astype(jnp.float32)        # 2 * (d // 2)
            phase_ref[...] = 100.0 * jnp.exp(even * neg_c)
            off_ref[...] = parity.astype(jnp.float32) * (math.pi / 2.0)

        # Single transcendental per element: cos(a) = sin(a + pi/2).
        arg = t_ref[...].astype(jnp.float32) * phase_ref[...] + off_ref[...]
        o_ref[...] = x_ref[...].astype(jnp.float32) + jnp.sin(arg)

    return kernel


def positional_encoding(x, t, dim_embedding):
    """x: (B, D, N) float dtype, t: (B, N) -> (B, D, N) float32."""
    B, D, N = x.shape
    assert D == dim_embedding and D % 2 == 0
    assert t.shape == (B, N)

    # Lane-folding factor: smallest P with (P * N) % 128 == 0.
    P = 128 // math.gcd(N, 128)
    if D % P == 0:
        G, L = D // P, P * N
        padded = False
        x_in = x.reshape(B, G, L)                                  # free, row-major preserving
        t_in = jnp.broadcast_to(t[:, None, :], (B, P, N)).reshape(B, 1, L)
    else:
        # Fallback: pad N up to a multiple of 128 -> keep unmasked lane-dense
        # stores; padded lanes are computed and sliced off afterwards.
        n_pad = ((N + 127) // 128) * 128
        P, G, L = 1, D, n_pad
        padded = True
        x_in = jnp.pad(x, ((0, 0), (0, 0), (0, n_pad - N)))
        t_in = jnp.pad(t, ((0, 0), (0, n_pad - N))).reshape(B, 1, L)

    # Batch rows per grid step: largest divisor of B with <= ~4 MiB per x/out
    # block (equal blocks -> no padded garbage rows and a balanced megacore
    # split; tiny shapes collapse to a single grid step).  Prefer an even
    # block count so the outer "parallel" axis splits 1:1 across v7x's 2 TCs.
    row_bytes = G * L * 4
    target_bytes = 4 * 1024 * 1024
    divisors = [d for d in range(1, B + 1) if B % d == 0]
    cands = [d for d in divisors if d * row_bytes <= target_bytes] or [1]
    bt = max(cands)
    if (B // bt) > 1 and (B // bt) % 2 != 0:
        even_cands = [d for d in cands if (B // d) % 2 == 0]
        if even_cands:
            bt = max(even_cands)
    n_blocks = B // bt
    if n_blocks > 1 and n_blocks % 2 == 0:
        n_outer, n_inner = 2, n_blocks // 2   # outer axis sharded across v7x cores
    else:
        n_outer, n_inner = 1, n_blocks        # single-TC friendly (v5e / v6e)

    blk = lambda i, j: (i * n_inner + j, 0, 0)

    out = pl.pallas_call(
        _make_kernel(D, G, P, N, L),
        out_shape=jax.ShapeDtypeStruct((B, G, L), jnp.float32),
        grid=(n_outer, n_inner),
        in_specs=[
            pl.BlockSpec((bt, G, L), blk),   # x, native dtype (cast in-kernel)
            pl.BlockSpec((bt, 1, L), blk),   # t, lane-tiled across the P groups
        ],
        out_specs=pl.BlockSpec((bt, G, L), blk),
        scratch_shapes=[
            pltpu.VMEM((G, L), jnp.float32),   # phase (built once per core)
            pltpu.VMEM((G, L), jnp.float32),   # sin/cos offset: 0 or pi/2
        ],
        compiler_params=pltpu.CompilerParams(
            dimension_semantics=("parallel", "arbitrary"),
            vmem_limit_bytes=40 * 1024 * 1024,
        ),
    )(x_in, t_in)

    if padded:
        return out[:, :, :N]                  # out is already (B, D, n_pad)
    return out.reshape(B, D, N)


def _reference(x, t, dim_embedding):
    """Pure-JAX mirror of the PyTorch forward (sin/cos pair)."""
    B, N = t.shape
    D = dim_embedding
    _2i = jnp.arange(0, D, 2, dtype=jnp.float32)
    phase = 100.0 / (1000.0 ** (_2i / D))                 # (D//2,)
    arg = t[:, None, :].astype(jnp.float32) * phase[None, :, None]
    enc = jnp.zeros((B, D, N), jnp.float32)
    enc = enc.at[:, 0::2, :].set(jnp.sin(arg))
    enc = enc.at[:, 1::2, :].set(jnp.cos(arg))
    return x.astype(jnp.float32) + enc


if __name__ == "__main__":
    B, D, N = 8, 32, 16
    key = jax.random.PRNGKey(0)
    kx, kt = jax.random.split(key)
    x = jax.random.normal(kx, (B, D, N), dtype=jnp.float32)
    t = jax.random.uniform(kt, (B, N), dtype=jnp.float32)   # normalized event times

    out = jax.block_until_ready(positional_encoding(x, t, D))
    ref = _reference(x, t, D)

    assert out.shape == (B, D, N) and out.dtype == jnp.float32
    # 2e-5 abs tolerance: in-kernel exp-based phase + cos = sin(x + pi/2) differ
    # from the reference's pow/cos lowering by a few f32 ulps at arg <= 100.
    assert jnp.allclose(out, ref, atol=2e-5, rtol=1e-5), float(jnp.max(jnp.abs(out - ref)))
    print("KERNEL_OK")
</pallas_src>

<mosaic_0001>
module attributes {stable_mosaic.version = 11 : i64} {
  func.func @kernel(%arg0: i32, %arg1: i32, %arg2: memref<8x4x128xf32, #tpu.memory_space<vmem>>, %arg3: memref<8x1x128xf32, #tpu.memory_space<vmem>>, %arg4: memref<8x4x128xf32, #tpu.memory_space<vmem>>, %arg5: memref<4x128xf32, #tpu.memory_space<vmem>>, %arg6: memref<4x128xf32, #tpu.memory_space<vmem>>) attributes {dimension_semantics = [#tpu.dimension_semantics<parallel>, #tpu.dimension_semantics<arbitrary>], iteration_bounds = array<i64: 1, 1>, scalar_prefetch = 0 : i64, scratch_operands = 2 : i64, tpu.core_type = #tpu.core_type<tc>, window_params = [{transform_indices = @transform_0, window_bounds = array<i64: 8, 4, 128>}, {transform_indices = @transform_1, window_bounds = array<i64: 8, 1, 128>}, {transform_indices = @transform_2, window_bounds = array<i64: 8, 4, 128>}]} {
    %c0_i32 = arith.constant 0 : i32
    %0 = arith.cmpi eq, %arg1, %c0_i32 : i32
    %1 = arith.extui %0 : i1 to i32
    %c0_i32_0 = arith.constant 0 : i32
    %2 = arith.cmpi ne, %1, %c0_i32_0 : i32
    scf.if %2 {
      %17 = tpu.iota {dimensions = array<i32: 0>} : vector<4x128xi32>
      %18 = tpu.iota {dimensions = array<i32: 1>} : vector<4x128xi32>
      %c0_i32_13 = arith.constant 0 : i32
      %19 = vector.broadcast %c0_i32_13 : i32 to vector<4x128xi32>
      %c16_i32 = arith.constant 16 : i32
      %20 = vector.broadcast %c16_i32 : i32 to vector<4x128xi32>
      %21 = arith.cmpi sge, %18, %20 : vector<4x128xi32>
      %22 = arith.extui %21 : vector<4x128xi1> to vector<4x128xi32>
      %23 = arith.addi %19, %22 : vector<4x128xi32>
      %c32_i32 = arith.constant 32 : i32
      %24 = vector.broadcast %c32_i32 : i32 to vector<4x128xi32>
      %25 = arith.cmpi sge, %18, %24 : vector<4x128xi32>
      %26 = arith.extui %25 : vector<4x128xi1> to vector<4x128xi32>
      %27 = arith.addi %23, %26 : vector<4x128xi32>
      %c48_i32 = arith.constant 48 : i32
      %28 = vector.broadcast %c48_i32 : i32 to vector<4x128xi32>
      %29 = arith.cmpi sge, %18, %28 : vector<4x128xi32>
      %30 = arith.extui %29 : vector<4x128xi1> to vector<4x128xi32>
      %31 = arith.addi %27, %30 : vector<4x128xi32>
      %c64_i32 = arith.constant 64 : i32
      %32 = vector.broadcast %c64_i32 : i32 to vector<4x128xi32>
      %33 = arith.cmpi sge, %18, %32 : vector<4x128xi32>
      %34 = arith.extui %33 : vector<4x128xi1> to vector<4x128xi32>
      %35 = arith.addi %31, %34 : vector<4x128xi32>
      %c80_i32 = arith.constant 80 : i32
      %36 = vector.broadcast %c80_i32 : i32 to vector<4x128xi32>
      %37 = arith.cmpi sge, %18, %36 : vector<4x128xi32>
      %38 = arith.extui %37 : vector<4x128xi1> to vector<4x128xi32>
      %39 = arith.addi %35, %38 : vector<4x128xi32>
      %c96_i32 = arith.constant 96 : i32
      %40 = vector.broadcast %c96_i32 : i32 to vector<4x128xi32>
      %41 = arith.cmpi sge, %18, %40 : vector<4x128xi32>
      %42 = arith.extui %41 : vector<4x128xi1> to vector<4x128xi32>
      %43 = arith.addi %39, %42 : vector<4x128xi32>
      %c112_i32 = arith.constant 112 : i32
      %44 = vector.broadcast %c112_i32 : i32 to vector<4x128xi32>
      %45 = arith.cmpi sge, %18, %44 : vector<4x128xi32>
      %46 = arith.extui %45 : vector<4x128xi1> to vector<4x128xi32>
      %47 = arith.addi %43, %46 : vector<4x128xi32>
      %c8_i32 = arith.constant 8 : i32
      %48 = vector.broadcast %c8_i32 : i32 to vector<4x128xi32>
      %49 = arith.muli %17, %48 : vector<4x128xi32>
      %50 = arith.addi %49, %47 : vector<4x128xi32>
      %c1_i32 = arith.constant 1 : i32
      %51 = vector.broadcast %c1_i32 : i32 to vector<4x128xi32>
      %52 = arith.andi %50, %51 : vector<4x128xi32>
      %53 = arith.subi %50, %52 : vector<4x128xi32>
      %54 = arith.sitofp %53 : vector<4x128xi32> to vector<4x128xf32>
      %cst = arith.constant -0.215867355 : f32
      %55 = vector.broadcast %cst : f32 to vector<4x128xf32>
      %56 = arith.mulf %54, %55 : vector<4x128xf32>
      %57 = math.exp %56 : vector<4x128xf32>
      %cst_14 = arith.constant 1.000000e+02 : f32
      %58 = vector.broadcast %cst_14 : f32 to vector<4x128xf32>
      %59 = arith.mulf %58, %57 : vector<4x128xf32>
      %c0_15 = arith.constant 0 : index
      %c0_16 = arith.constant 0 : index
      %60 = vector.load %arg5[%c0_15, %c0_16] : memref<4x128xf32, #tpu.memory_space<vmem>>, vector<4x128xf32>
      tpu.vector_store %arg5[%c0_15, %c0_16], %59 {strides = array<i32>} : memref<4x128xf32, #tpu.memory_space<vmem>>, vector<4x128xf32>,
      %61 = arith.sitofp %52 : vector<4x128xi32> to vector<4x128xf32>
      %cst_17 = arith.constant 1.57079637 : f32
      %62 = vector.broadcast %cst_17 : f32 to vector<4x128xf32>
      %63 = arith.mulf %61, %62 : vector<4x128xf32>
      %c0_18 = arith.constant 0 : index
      %c0_19 = arith.constant 0 : index
      %64 = vector.load %arg6[%c0_18, %c0_19] : memref<4x128xf32, #tpu.memory_space<vmem>>, vector<4x128xf32>
      tpu.vector_store %arg6[%c0_18, %c0_19], %63 {strides = array<i32>} : memref<4x128xf32, #tpu.memory_space<vmem>>, vector<4x128xf32>,
    } else {
    }
    %c0 = arith.constant 0 : index
    %c0_1 = arith.constant 0 : index
    %c0_2 = arith.constant 0 : index
    %3 = vector.load %arg3[%c0, %c0_1, %c0_2] : memref<8x1x128xf32, #tpu.memory_space<vmem>>, vector<8x1x128xf32>
    %c0_3 = arith.constant 0 : index
    %c0_4 = arith.constant 0 : index
    %4 = vector.load %arg5[%c0_3, %c0_4] : memref<4x128xf32, #tpu.memory_space<vmem>>, vector<4x128xf32>
    %5 = vector.shape_cast %4 : vector<4x128xf32> to vector<1x4x128xf32>
    %6 = vector.broadcast %3 : vector<8x1x128xf32> to vector<8x4x128xf32>
    %7 = vector.broadcast %5 : vector<1x4x128xf32> to vector<8x4x128xf32>
    %8 = arith.mulf %6, %7 : vector<8x4x128xf32>
    %c0_5 = arith.constant 0 : index
    %c0_6 = arith.constant 0 : index
    %9 = vector.load %arg6[%c0_5, %c0_6] : memref<4x128xf32, #tpu.memory_space<vmem>>, vector<4x128xf32>
    %10 = vector.shape_cast %9 : vector<4x128xf32> to vector<1x4x128xf32>
    %11 = vector.broadcast %10 : vector<1x4x128xf32> to vector<8x4x128xf32>
    %12 = arith.addf %8, %11 : vector<8x4x128xf32>
    %c0_7 = arith.constant 0 : index
    %c0_8 = arith.constant 0 : index
    %c0_9 = arith.constant 0 : index
    %13 = vector.load %arg2[%c0_7, %c0_8, %c0_9] : memref<8x4x128xf32, #tpu.memory_space<vmem>>, vector<8x4x128xf32>
    %14 = math.sin %12 : vector<8x4x128xf32>
    %15 = arith.addf %13, %14 : vector<8x4x128xf32>
    %c0_10 = arith.constant 0 : index
    %c0_11 = arith.constant 0 : index
    %c0_12 = arith.constant 0 : index
    %16 = vector.load %arg4[%c0_10, %c0_11, %c0_12] : memref<8x4x128xf32, #tpu.memory_space<vmem>>, vector<8x4x128xf32>
    tpu.vector_store %arg4[%c0_10, %c0_11, %c0_12], %15 {strides = array<i32>} : memref<8x4x128xf32, #tpu.memory_space<vmem>>, vector<8x4x128xf32>,
    return
  }
  func.func @transform_0(%arg0: i32, %arg1: i32) -> (i32, i32, i32) {
    %c1_i32 = arith.constant 1 : i32
    %0 = arith.muli %arg0, %c1_i32 : i32
    %1 = arith.addi %0, %arg1 : i32
    %c0_i32 = arith.constant 0 : i32
    %c0_i32_0 = arith.constant 0 : i32
    %c0_i32_1 = arith.constant 0 : i32
    return %1, %c0_i32, %c0_i32_0 : i32, i32, i32
  }
  func.func @transform_1(%arg0: i32, %arg1: i32) -> (i32, i32, i32) {
    %c1_i32 = arith.constant 1 : i32
    %0 = arith.muli %arg0, %c1_i32 : i32
    %1 = arith.addi %0, %arg1 : i32
    %c0_i32 = arith.constant 0 : i32
    %c0_i32_0 = arith.constant 0 : i32
    %c0_i32_1 = arith.constant 0 : i32
    return %1, %c0_i32, %c0_i32_0 : i32, i32, i32
  }
  func.func @transform_2(%arg0: i32, %arg1: i32) -> (i32, i32, i32) {
    %c1_i32 = arith.constant 1 : i32
    %0 = arith.muli %arg0, %c1_i32 : i32
    %1 = arith.addi %0, %arg1 : i32
    %c0_i32 = arith.constant 0 : i32
    %c0_i32_0 = arith.constant 0 : i32
    %c0_i32_1 = arith.constant 0 : i32
    return %1, %c0_i32, %c0_i32_0 : i32, i32, i32
  }
}

</mosaic_0001>

<llo_original>
// kernel: tpu_custom_call.1
$region0: #{tpu_custom_call.1}
  #allocation0 [shape = 'u32[]', space=smem, size = 0x4, offset = 0x4, fixed_abs, tag = 'smem constant byte address 0x4 - core index']
  #allocation1 [shape = 'u32[144,128]{1,0:T(1,128)}', space=vmem, size = 0x12000, scoped, tag = 'internal scratch']
  #allocation2 [shape = 'f32[4,128]{1,0:T(4,128)}', space=vmem, size = 0x800, scoped, tag = 'scratch operand']
  #allocation3 [shape = 'f32[4,128]{1,0:T(4,128)}', space=vmem, size = 0x800, scoped, tag = 'scratch operand']
  %s0 = inlined_call_operand.hbm [shape: f32[8,4,128], index: 0, kind: input, shape index: {}]
  %s1 = inlined_call_operand.hbm [shape: f32[8,1,128], index: 1, kind: input, shape index: {}]
  %s2 = inlined_call_operand.hbm [shape: f32[8,4,128], index: 2, kind: output, shape index: {}]
  %s3 = sld [smem:[#allocation0]]
  $region30: #{tpu_custom_call.1} parent=0
    _
  %s5 = ssub.s32 1, %s3
  %s6 = scalar_select 0, %s5, %s3
  $region1: #{tpu_custom_call.1} parent=0
    #allocation4 [shape = 'u8[16384]{0}', space=vmem, size = 0x4000, scoped, tag = 'input window, operand 0, single buffered']
    #allocation5 [shape = 's32[1]{0}', space=sflag, size = 0x4, scoped, tag = 'scoped memory for tpu_custom_call.1']
    #allocation6 [shape = 's32[1]{0}', space=sflag, size = 0x4, scoped, tag = 'scoped memory for tpu_custom_call.1']
    #allocation7 [shape = 'u8[4096]{0}', space=vmem, size = 0x1000, scoped, tag = 'input window, operand 1, single buffered']
    #allocation8 [shape = 's32[1]{0}', space=sflag, size = 0x4, scoped, tag = 'scoped memory for tpu_custom_call.1']
    #allocation9 [shape = 'u8[16384]{0}', space=vmem, size = 0x4000, scoped, tag = 'output window, operand 0, single buffered']
    %7 = vsyncpa [#allocation5], 0
    %8 = vsyncpa [#allocation8], 0
    %9 = vsyncpa [#allocation6], 0
    // Predicated region
    $region2: #{tpu_custom_call.1} parent=1 // pred_check
      _
    $region3: #{tpu_custom_call.1} parent=1 // pred_check_branch
      %11 = sbr.rel (0) target = $region5
    $region4: #{tpu_custom_call.1} parent=1 // pred_region
      %s12 = sadd.s32 0, 0
      %s13 = smul.u32 8, %s12
      %s15 = ssub.s32 512, 512
      %16 = vsyncadd [#allocation5], %s15
      %s17 = smul.addr %s13, 64
      %s18 = scalar_lea.hbm %s0, %s17
      %s19 = sshll.u32 [#allocation4], 4
      %s20 = int_to_ptr.vmem [resolvable:$true] %s19
      %25 = dma.hbm_to_vmem [thread:$0]  %s18, 512, %s20, [#allocation5], 64, 64, 4
    $region5: #{tpu_custom_call.1} parent=1 // pred_fallthru
      _
    // Predicated region
    $region6: #{tpu_custom_call.1} parent=1 // pred_check
      _
    $region7: #{tpu_custom_call.1} parent=1 // pred_check_branch
      %27 = sbr.rel (0) target = $region9
    $region8: #{tpu_custom_call.1} parent=1 // pred_region
      %s28 = sadd.s32 0, 0
      %s29 = smul.u32 8, %s28
      %s31 = ssub.s32 128, 128
      %32 = vsyncadd [#allocation8], %s31
      %s33 = smul.addr %s29, 16
      %s34 = scalar_lea.hbm %s1, %s33
      %s35 = sshll.u32 [#allocation7], 4
      %s36 = int_to_ptr.vmem [resolvable:$true] %s35
      %41 = dma.hbm_to_vmem [thread:$0]  %s34, 128, %s36, [#allocation8], 16, 16, 1
    $region9: #{tpu_custom_call.1} parent=1 // pred_fallthru
      _
    // Predicated region
    $region10: #{tpu_custom_call.1} parent=1 // pred_check
      _
    $region11: #{tpu_custom_call.1} parent=1 // pred_check_branch
      %43 = sbr.rel (0) target = $region13
    $region12: #{tpu_custom_call.1} parent=1 // pred_region
      %44 = dma.done [#allocation5], 512
    $region13: #{tpu_custom_call.1} parent=1 // pred_fallthru
      _
    // Predicated region
    $region14: #{tpu_custom_call.1} parent=1 // pred_check
      _
    $region15: #{tpu_custom_call.1} parent=1 // pred_check_branch
      %46 = sbr.rel (0) target = $region17
    $region16: #{tpu_custom_call.1} parent=1 // pred_region
      %47 = dma.done [#allocation8], 128
    $region17: #{tpu_custom_call.1} parent=1 // pred_fallthru
      _
    %s48 = sadd.s32 0, 0
    %s49 = smul.u32 8, %s48
    %s50 = sadd.s32 0, 0
    %s51 = smul.u32 8, %s50
    %s52 = sadd.s32 0, 0
    %s53 = smul.u32 8, %s52
    %p54 = scmp.eq.s32.totalorder 0, 0
    // Predicated region
    $region18: #{tpu_custom_call.1} parent=1 // pred_check
      %p55 = pneg %p54
    $region19: #{tpu_custom_call.1} parent=1 // pred_check_branch
      %57 = sbr.rel (%p55) target = $region21
    $region20: #{tpu_custom_call.1} parent=1 // pred_region
      %v58 = vlaneseq
      %v59 = vshrl.u32 %v58, 7
      %v60 = vlaneseq
      %v61 = vand.u32 %v60, 127
      %vm62 = vcmp.ge.s32.totalorder %v61, 16
      %v63 = vsel %vm62, 1, 0
      %vm64 = vcmp.ge.s32.totalorder %v61, 32
      %v65 = vsel %vm64, 1, 0
      %v66 = vadd.s32 %v63, %v65
      %vm67 = vcmp.ge.s32.totalorder %v61, 48
      %v68 = vsel %vm67, 1, 0
      %v69 = vadd.s32 %v66, %v68
      %vm70 = vcmp.ge.s32.totalorder %v61, 64
      %v71 = vsel %vm70, 1, 0
      %v72 = vadd.s32 %v69, %v71
      %vm73 = vcmp.ge.s32.totalorder %v61, 80
      %v74 = vsel %vm73, 1, 0
      %v75 = vadd.s32 %v72, %v74
      %vm76 = vcmp.ge.s32.totalorder %v61, 96
      %v77 = vsel %vm76, 1, 0
      %v78 = vadd.s32 %v75, %v77
      %vm79 = vcmp.ge.s32.totalorder %v61, 112
      %v80 = vsel %vm79, 1, 0
      %v81 = vadd.s32 %v78, %v80
      %v82 = vmul.u32 %v59, 8
      %v83 = vadd.s32 %v82, %v81
      %v84 = vand.u32 %v83, 1
      %v85 = vsub.s32 %v83, %v84
      %v86 = vcvt.s32.f32 %v85
      %v87 = vmul.f32 %v86, -0.21586736
      %v88 = vmul.f32 %v87, 1.442695
      %v89 = vpow.pop %v88
      %v90 = vmul.f32 %v89, 100.0
      %91 = vst [vmem:[#allocation2] sm:$0xf] %v90
      %v92 = vcvt.s32.f32 %v84
      %v93 = vmul.f32 %v92, 1.5707964
      %94 = vst [vmem:[#allocation3] sm:$0xf] %v93
    $region21: #{tpu_custom_call.1} parent=1 // pred_fallthru
      _
    %v95 = vld [vmem:[#allocation7] sm:$0x1]
    %v96 = vld [vmem:[#allocation7 + $0x1] sm:$0x1]
    %v97 = vld [vmem:[#allocation7 + $0x2] sm:$0x1]
    %v98 = vld [vmem:[#allocation7 + $0x3] sm:$0x1]
    %v99 = vld [vmem:[#allocation7 + $0x4] sm:$0x1]
    %v100 = vld [vmem:[#allocation7 + $0x5] sm:$0x1]
    %v101 = vld [vmem:[#allocation7 + $0x6] sm:$0x1]
    %v102 = vld [vmem:[#allocation7 + $0x7] sm:$0x1]
    %v103 = vld [vmem:[#allocation2] sm:$0xf]
    %v112 = vlaneseq
    %v113 = vshrl.u32 %v112, 7
    %v114 = vsub.s32 0, %v113
    %v115 = vrot.slane %v95, %v114
    %v116 = vlaneseq
    %v117 = vshrl.u32 %v116, 7
    %v118 = vsub.s32 0, %v117
    %v119 = vrot.slane %v96, %v118
    %v120 = vlaneseq
    %v121 = vshrl.u32 %v120, 7
    %v122 = vsub.s32 0, %v121
    %v123 = vrot.slane %v97, %v122
    %v124 = vlaneseq
    %v125 = vshrl.u32 %v124, 7
    %v126 = vsub.s32 0, %v125
    %v127 = vrot.slane %v98, %v126
    %v128 = vlaneseq
    %v129 = vshrl.u32 %v128, 7
    %v130 = vsub.s32 0, %v129
    %v131 = vrot.slane %v99, %v130
    %v132 = vlaneseq
    %v133 = vshrl.u32 %v132, 7
    %v134 = vsub.s32 0, %v133
    %v135 = vrot.slane %v100, %v134
    %v136 = vlaneseq
    %v137 = vshrl.u32 %v136, 7
    %v138 = vsub.s32 0, %v137
    %v139 = vrot.slane %v101, %v138
    %v140 = vlaneseq
    %v141 = vshrl.u32 %v140, 7
    %v142 = vsub.s32 0, %v141
    %v143 = vrot.slane %v102, %v142
    %v152 = vmul.f32 %v115, %v103
    %v153 = vmul.f32 %v119, %v103
    %v154 = vmul.f32 %v123, %v103
    %v155 = vmul.f32 %v127, %v103
    %v156 = vmul.f32 %v131, %v103
    %v157 = vmul.f32 %v135, %v103
    %v158 = vmul.f32 %v139, %v103
    %v159 = vmul.f32 %v143, %v103
    %v160 = vld [vmem:[#allocation3] sm:$0xf]
    %v161 = vadd.f32 %v152, %v160
    %v162 = vadd.f32 %v153, %v160
    %v163 = vadd.f32 %v154, %v160
    %v164 = vadd.f32 %v155, %v160
    %v165 = vadd.f32 %v156, %v160
    %v166 = vadd.f32 %v157, %v160
    %v167 = vadd.f32 %v158, %v160
    %v168 = vadd.f32 %v159, %v160
    %v169 = vld [vmem:[#allocation4] sm:$0xf]
    %v170 = vld [vmem:[#allocation4 + $0x4] sm:$0xf]
    %v171 = vld [vmem:[#allocation4 + $0x8] sm:$0xf]
    %v172 = vld [vmem:[#allocation4 + $0xc] sm:$0xf]
    %v173 = vld [vmem:[#allocation4 + $0x10] sm:$0xf]
    %v174 = vld [vmem:[#allocation4 + $0x14] sm:$0xf]
    %v175 = vld [vmem:[#allocation4 + $0x18] sm:$0xf]
    %v176 = vld [vmem:[#allocation4 + $0x1c] sm:$0xf]
    %v177 = vand.u32 2147483647, %v161
    %vm178 = vcmp.le.f32.partialorder %v177, 0.7853982
    %vm179 = vcmp.lt.s32.totalorder %v161, 0
    %v180 = vand.u32 %v161, 2139095040
    %v181 = vshrl.u32 %v180, 23
    %v182 = vsub.s32 %v181, 127
    %v183 = vand.u32 2147483647, %v161
    %v184 = vand.u32 %v183, 8388607
    %v185 = vor.u32 %v184, 8388608
    %v186 = vsub.s32 0, %v185
    %v187 = vadd.s32 %v182, 1
    %vm188 = vcmp.gt.s32.totalorder %v187, 0
    %v189 = vsel %vm188, %v187, 0
    %v190 = vshrl.u32 %v189, 5
    %v191 = vand.u32 %v189, 31
    %v192 = vsub.s32 32, %v191
    %v193 = vshrl.u32 683565275, %v192
    %v194 = vshll.u32 683565275, %v191
    %v195 = vshrl.u32 2475754826, %v192
    %v196 = vor.u32 %v194, %v195
    %v197 = vshll.u32 2475754826, %v191
    %v198 = vshrl.u32 2131351028, %v192
    %v199 = vor.u32 %v197, %v198
    %v200 = vshll.u32 2131351028, %v191
    %v201 = vshrl.u32 2102212464, %v192
    %v202 = vor.u32 %v200, %v201
    %v203 = vshll.u32 2102212464, %v191
    %v204 = vshrl.u32 920167782, %v192
    %v205 = vor.u32 %v203, %v204
    %v206 = vshll.u32 920167782, %v191
    %v207 = vshrl.u32 1326507024, %v192
    %v208 = vor.u32 %v206, %v207
    %vm209 = vcmp.lt.s32.totalorder %v190, 1
    %vm210 = vcmp.lt.s32.totalorder %v190, 2
    %vm211 = vcmp.lt.s32.totalorder %v190, 3
    %vm212 = vcmp.lt.s32.totalorder %v190, 4
    %v213 = vsel %vm209, %v193, %v196
    %v214 = vsel %vm212, %v202, 2102212464
    %v215 = vsel %vm211, %v199, %v214
    %v216 = vsel %vm210, %v213, %v215
    %v217 = vsel %vm209, %v196, %v199
    %v218 = vsel %vm212, %v205, 920167782
    %v219 = vsel %vm211, %v202, %v218
    %v220 = vsel %vm210, %v217, %v219
    %v221 = vsel %vm209, %v199, %v202
    %v222 = vsel %vm212, %v208, 1326507024
    %v223 = vsel %vm211, %v205, %v222
    %v224 = vsel %vm210, %v221, %v223
    %v225 = vshll.u32 %v185, 8
    %v226 = vmul.u32.u64.compose %v225, %v224
    %v227 = vextract.low.u32 %v226
    %v228 = vextract.high.u32 %v226
    %v229 = vmul.u32.u64.compose %v225, %v220
    %v230 = vextract.low.u32 %v229
    %v231 = vextract.high.u32 %v229
    %v232 = vmul.u32 %v225, %v216
    %v233 = vadd.s32 %v228, %v230
    %vm234 = vc.u32 %v228, %v230
    %v235 = vadd.s32 %v231, 1
    %v236 = vsel %vm234, %v235, %v231
    %v237 = vadd.s32 %v232, %v236
    %v238 = vadd.s32 %v237, 536870912
    %v239 = vshrl.u32 %v238, 30
    %v240 = vshll.u32 %v239, 30
    %v241 = vsub.s32 %v237, %v240
    %vm242 = vcmp.lt.s32.totalorder %v241, 0
    %v243 = vsub.s32 0, %v241
    %v244 = vsel %vm242, %v243, %v241
    %v245 = vclz %v244
    %v246 = vsub.s32 %v245, 2
    %vm247 = vcmp.gt.s32.totalorder 0, %v246
    %v248 = vsel %vm247, 0, %v246
    %v249 = vsub.s32 32, %v248
    %v250 = vshll.u32 %v241, %v248
    %v251 = vshrl.u32 %v233, %v249
    %v252 = vor.u32 %v250, %v251
    %v253 = vsub.s32 4294967266, %v248
    %v254 = vadd.s32 %v253, 127
    %v255 = vshll.u32 %v254, 23
    %v256 = vor.u32 4788187, %v255
    %v257 = vand.u32 2147483647, %v256
    %v259 = vcvt.s32.f32 %v252
    %v260 = vmul.f32 %v259, %v257
    %v261 = vxor.u32 %v260, 2147483648
    %v262 = vsel %vm179, %v261, %v260
    %v263 = vsub.s32 4, %v239
    %v264 = vsel %vm179, %v263, %v239
    %v265 = vsel %vm178, %v161, %v262
    %v266 = vsel %vm178, 0, %v264
    %v267 = vcosq.f32.pop %v265
    %v268 = vsinq.f32.pop %v265
    %vm269 = vweird.f32 %v161
    %v270 = vadd.s32 %v266, 3
    %v271 = vand.u32 %v270, 3
    %vm272 = vcmp.lt.s32.totalorder %v271, 2
    %vm273 = vcmp.eq.s32.totalorder %v271, 0
    %v274 = vxor.u32 %v268, 2147483648
    %v275 = vsel %vm273, %v267, %v274
    %vm276 = vcmp.eq.s32.totalorder %v271, 2
    %v277 = vxor.u32 %v267, 2147483648
    %v278 = vsel %vm276, %v277, %v268
    %v279 = vsel %vm272, %v275, %v278
    %v280 = vsel %vm269, nan, %v279
    %v281 = vand.u32 2147483647, %v162
    %vm282 = vcmp.le.f32.partialorder %v281, 0.7853982
    %vm283 = vcmp.lt.s32.totalorder %v162, 0
    %v284 = vand.u32 %v162, 2139095040
    %v285 = vshrl.u32 %v284, 23
    %v286 = vsub.s32 %v285, 127
    %v287 = vand.u32 2147483647, %v162
    %v288 = vand.u32 %v287, 8388607
    %v289 = vor.u32 %v288, 8388608
    %v290 = vsub.s32 0, %v289
    %v291 = vadd.s32 %v286, 1
    %vm292 = vcmp.gt.s32.totalorder %v291, 0
    %v293 = vsel %vm292, %v291, 0
    %v294 = vshrl.u32 %v293, 5
    %v295 = vand.u32 %v293, 31
    %v296 = vsub.s32 32, %v295
    %v297 = vshrl.u32 683565275, %v296
    %v298 = vshll.u32 683565275, %v295
    %v299 = vshrl.u32 2475754826, %v296
    %v300 = vor.u32 %v298, %v299
    %v301 = vshll.u32 2475754826, %v295
    %v302 = vshrl.u32 2131351028, %v296
    %v303 = vor.u32 %v301, %v302
    %v304 = vshll.u32 2131351028, %v295
    %v305 = vshrl.u32 2102212464, %v296
    %v306 = vor.u32 %v304, %v305
    %v307 = vshll.u32 2102212464, %v295
    %v308 = vshrl.u32 920167782, %v296
    %v309 = vor.u32 %v307, %v308
    %v310 = vshll.u32 920167782, %v295
    %v311 = vshrl.u32 1326507024, %v296
    %v312 = vor.u32 %v310, %v311
    %vm313 = vcmp.lt.s32.totalorder %v294, 1
    %vm314 = vcmp.lt.s32.totalorder %v294, 2
    %vm315 = vcmp.lt.s32.totalorder %v294, 3
    %vm316 = vcmp.lt.s32.totalorder %v294, 4
    %v317 = vsel %vm313, %v297, %v300
    %v318 = vsel %vm316, %v306, 2102212464
    %v319 = vsel %vm315, %v303, %v318
    %v320 = vsel %vm314, %v317, %v319
    %v321 = vsel %vm313, %v300, %v303
    %v322 = vsel %vm316, %v309, 920167782
    %v323 = vsel %vm315, %v306, %v322
    %v324 = vsel %vm314, %v321, %v323
    %v325 = vsel %vm313, %v303, %v306
    %v326 = vsel %vm316, %v312, 1326507024
    %v327 = vsel %vm315, %v309, %v326
    %v328 = vsel %vm314, %v325, %v327
    %v329 = vshll.u32 %v289, 8
    %v330 = vmul.u32.u64.compose %v329, %v328
    %v331 = vextract.low.u32 %v330
    %v332 = vextract.high.u32 %v330
    %v333 = vmul.u32.u64.compose %v329, %v324
    %v334 = vextract.low.u32 %v333
    %v335 = vextract.high.u32 %v333
    %v336 = vmul.u32 %v329, %v320
    %v337 = vadd.s32 %v332, %v334
    %vm338 = vc.u32 %v332, %v334
    %v339 = vadd.s32 %v335, 1
    %v340 = vsel %vm338, %v339, %v335
    %v341 = vadd.s32 %v336, %v340
    %v342 = vadd.s32 %v341, 536870912
    %v343 = vshrl.u32 %v342, 30
    %v344 = vshll.u32 %v343, 30
    %v345 = vsub.s32 %v341, %v344
    %vm346 = vcmp.lt.s32.totalorder %v345, 0
    %v347 = vsub.s32 0, %v345
    %v348 = vsel %vm346, %v347, %v345
    %v349 = vclz %v348
    %v350 = vsub.s32 %v349, 2
    %vm351 = vcmp.gt.s32.totalorder 0, %v350
    %v352 = vsel %vm351, 0, %v350
    %v353 = vsub.s32 32, %v352
    %v354 = vshll.u32 %v345, %v352
    %v355 = vshrl.u32 %v337, %v353
    %v356 = vor.u32 %v354, %v355
    %v357 = vsub.s32 4294967266, %v352
    %v358 = vadd.s32 %v357, 127
    %v359 = vshll.u32 %v358, 23
    %v360 = vor.u32 4788187, %v359
    %v361 = vand.u32 2147483647, %v360
    %v363 = vcvt.s32.f32 %v356
    %v364 = vmul.f32 %v363, %v361
    %v365 = vxor.u32 %v364, 2147483648
    %v366 = vsel %vm283, %v365, %v364
    %v367 = vsub.s32 4, %v343
    %v368 = vsel %vm283, %v367, %v343
    %v369 = vsel %vm282, %v162, %v366
    %v370 = vsel %vm282, 0, %v368
    %v371 = vcosq.f32.pop %v369
    %v372 = vsinq.f32.pop %v369
    %vm373 = vweird.f32 %v162
    %v374 = vadd.s32 %v370, 3
    %v375 = vand.u32 %v374, 3
    %vm376 = vcmp.lt.s32.totalorder %v375, 2
    %vm377 = vcmp.eq.s32.totalorder %v375, 0
    %v378 = vxor.u32 %v372, 2147483648
    %v379 = vsel %vm377, %v371, %v378
    %vm380 = vcmp.eq.s32.totalorder %v375, 2
    %v381 = vxor.u32 %v371, 2147483648
    %v382 = vsel %vm380, %v381, %v372
    %v383 = vsel %vm376, %v379, %v382
    %v384 = vsel %vm373, nan, %v383
    %v385 = vand.u32 2147483647, %v163
    %vm386 = vcmp.le.f32.partialorder %v385, 0.7853982
    %vm387 = vcmp.lt.s32.totalorder %v163, 0
    %v388 = vand.u32 %v163, 2139095040
    %v389 = vshrl.u32 %v388, 23
    %v390 = vsub.s32 %v389, 127
    %v391 = vand.u32 2147483647, %v163
    %v392 = vand.u32 %v391, 8388607
    %v393 = vor.u32 %v392, 8388608
    %v394 = vsub.s32 0, %v393
    %v395 = vadd.s32 %v390, 1
    %vm396 = vcmp.gt.s32.totalorder %v395, 0
    %v397 = vsel %vm396, %v395, 0
    %v398 = vshrl.u32 %v397, 5
    %v399 = vand.u32 %v397, 31
    %v400 = vsub.s32 32, %v399
    %v401 = vshrl.u32 683565275, %v400
    %v402 = vshll.u32 683565275, %v399
    %v403 = vshrl.u32 2475754826, %v400
    %v404 = vor.u32 %v402, %v403
    %v405 = vshll.u32 2475754826, %v399
    %v406 = vshrl.u32 2131351028, %v400
    %v407 = vor.u32 %v405, %v406
    %v408 = vshll.u32 2131351028, %v399
    %v409 = vshrl.u32 2102212464, %v400
    %v410 = vor.u32 %v408, %v409
    %v411 = vshll.u32 2102212464, %v399
    %v412 = vshrl.u32 920167782, %v400
    %v413 = vor.u32 %v411, %v412
    %v414 = vshll.u32 920167782, %v399
    %v415 = vshrl.u32 1326507024, %v400
    %v416 = vor.u32 %v414, %v415
    %vm417 = vcmp.lt.s32.totalorder %v398, 1
    %vm418 = vcmp.lt.s32.totalorder %v398, 2
    %vm419 = vcmp.lt.s32.totalorder %v398, 3
    %vm420 = vcmp.lt.s32.totalorder %v398, 4
    %v421 = vsel %vm417, %v401, %v404
    %v422 = vsel %vm420, %v410, 2102212464
    %v423 = vsel %vm419, %v407, %v422
    %v424 = vsel %vm418, %v421, %v423
    %v425 = vsel %vm417, %v404, %v407
    %v426 = vsel %vm420, %v413, 920167782
    %v427 = vsel %vm419, %v410, %v426
    %v428 = vsel %vm418, %v425, %v427
    %v429 = vsel %vm417, %v407, %v410
    %v430 = vsel %vm420, %v416, 1326507024
    %v431 = vsel %vm419, %v413, %v430
    %v432 = vsel %vm418, %v429, %v431
    %v433 = vshll.u32 %v393, 8
    %v434 = vmul.u32.u64.compose %v433, %v432
    %v435 = vextract.low.u32 %v434
    %v436 = vextract.high.u32 %v434
    %v437 = vmul.u32.u64.compose %v433, %v428
    %v438 = vextract.low.u32 %v437
    %v439 = vextract.high.u32 %v437
    %v440 = vmul.u32 %v433, %v424
    %v441 = vadd.s32 %v436, %v438
    %vm442 = vc.u32 %v436, %v438
    %v443 = vadd.s32 %v439, 1
    %v444 = vsel %vm442, %v443, %v439
    %v445 = vadd.s32 %v440, %v444
    %v446 = vadd.s32 %v445, 536870912
    %v447 = vshrl.u32 %v446, 30
    %v448 = vshll.u32 %v447, 30
    %v449 = vsub.s32 %v445, %v448
    %vm450 = vcmp.lt.s32.totalorder %v449, 0
    %v451 = vsub.s32 0, %v449
    %v452 = vsel %vm450, %v451, %v449
    %v453 = vclz %v452
    %v454 = vsub.s32 %v453, 2
    %vm455 = vcmp.gt.s32.totalorder 0, %v454
    %v456 = vsel %vm455, 0, %v454
    %v457 = vsub.s32 32, %v456
    %v458 = vshll.u32 %v449, %v456
    %v459 = vshrl.u32 %v441, %v457
    %v460 = vor.u32 %v458, %v459
    %v461 = vsub.s32 4294967266, %v456
    %v462 = vadd.s32 %v461, 127
    %v463 = vshll.u32 %v462, 23
    %v464 = vor.u32 4788187, %v463
    %v465 = vand.u32 2147483647, %v464
    %v467 = vcvt.s32.f32 %v460
    %v468 = vmul.f32 %v467, %v465
    %v469 = vxor.u32 %v468, 2147483648
    %v470 = vsel %vm387, %v469, %v468
    %v471 = vsub.s32 4, %v447
    %v472 = vsel %vm387, %v471, %v447
    %v473 = vsel %vm386, %v163, %v470
    %v474 = vsel %vm386, 0, %v472
    %v475 = vcosq.f32.pop %v473
    %v476 = vsinq.f32.pop %v473
    %vm477 = vweird.f32 %v163
    %v478 = vadd.s32 %v474, 3
    %v479 = vand.u32 %v478, 3
    %vm480 = vcmp.lt.s32.totalorder %v479, 2
    %vm481 = vcmp.eq.s32.totalorder %v479, 0
    %v482 = vxor.u32 %v476, 2147483648
    %v483 = vsel %vm481, %v475, %v482
    %vm484 = vcmp.eq.s32.totalorder %v479, 2
    %v485 = vxor.u32 %v475, 2147483648
    %v486 = vsel %vm484, %v485, %v476
    %v487 = vsel %vm480, %v483, %v486
    %v488 = vsel %vm477, nan, %v487
    %v489 = vand.u32 2147483647, %v164
    %vm490 = vcmp.le.f32.partialorder %v489, 0.7853982
    %vm491 = vcmp.lt.s32.totalorder %v164, 0
    %v492 = vand.u32 %v164, 2139095040
    %v493 = vshrl.u32 %v492, 23
    %v494 = vsub.s32 %v493, 127
    %v495 = vand.u32 2147483647, %v164
    %v496 = vand.u32 %v495, 8388607
    %v497 = vor.u32 %v496, 8388608
    %v498 = vsub.s32 0, %v497
    %v499 = vadd.s32 %v494, 1
    %vm500 = vcmp.gt.s32.totalorder %v499, 0
    %v501 = vsel %vm500, %v499, 0
    %v502 = vshrl.u32 %v501, 5
    %v503 = vand.u32 %v501, 31
    %v504 = vsub.s32 32, %v503
    %v505 = vshrl.u32 683565275, %v504
    %v506 = vshll.u32 683565275, %v503
    %v507 = vshrl.u32 2475754826, %v504
    %v508 = vor.u32 %v506, %v507
    %v509 = vshll.u32 2475754826, %v503
    %v510 = vshrl.u32 2131351028, %v504
    %v511 = vor.u32 %v509, %v510
    %v512 = vshll.u32 2131351028, %v503
    %v513 = vshrl.u32 2102212464, %v504
    %v514 = vor.u32 %v512, %v513
    %v515 = vshll.u32 2102212464, %v503
    %v516 = vshrl.u32 920167782, %v504
    %v517 = vor.u32 %v515, %v516
    %v518 = vshll.u32 920167782, %v503
    %v519 = vshrl.u32 1326507024, %v504
    %v520 = vor.u32 %v518, %v519
    %vm521 = vcmp.lt.s32.totalorder %v502, 1
    %vm522 = vcmp.lt.s32.totalorder %v502, 2
    %vm523 = vcmp.lt.s32.totalorder %v502, 3
    %vm524 = vcmp.lt.s32.totalorder %v502, 4
    %v525 = vsel %vm521, %v505, %v508
    %v526 = vsel %vm524, %v514, 2102212464
    %v527 = vsel %vm523, %v511, %v526
    %v528 = vsel %vm522, %v525, %v527
    %v529 = vsel %vm521, %v508, %v511
    %v530 = vsel %vm524, %v517, 920167782
    %v531 = vsel %vm523, %v514, %v530
    %v532 = vsel %vm522, %v529, %v531
    %v533 = vsel %vm521, %v511, %v514
    %v534 = vsel %vm524, %v520, 1326507024
    %v535 = vsel %vm523, %v517, %v534
    %v536 = vsel %vm522, %v533, %v535
    %v537 = vshll.u32 %v497, 8
    %v538 = vmul.u32.u64.compose %v537, %v536
    %v539 = vextract.low.u32 %v538
    %v540 = vextract.high.u32 %v538
    %v541 = vmul.u32.u64.compose %v537, %v532
    %v542 = vextract.low.u32 %v541
    %v543 = vextract.high.u32 %v541
    %v544 = vmul.u32 %v537, %v528
    %v545 = vadd.s32 %v540, %v542
    %vm546 = vc.u32 %v540, %v542
    %v547 = vadd.s32 %v543, 1
    %v548 = vsel %vm546, %v547, %v543
    %v549 = vadd.s32 %v544, %v548
    %v550 = vadd.s32 %v549, 536870912
    %v551 = vshrl.u32 %v550, 30
    %v552 = vshll.u32 %v551, 30
    %v553 = vsub.s32 %v549, %v552
    %vm554 = vcmp.lt.s32.totalorder %v553, 0
    %v555 = vsub.s32 0, %v553
    %v556 = vsel %vm554, %v555, %v553
    %v557 = vclz %v556
    %v558 = vsub.s32 %v557, 2
    %vm559 = vcmp.gt.s32.totalorder 0, %v558
    %v560 = vsel %vm559, 0, %v558
    %v561 = vsub.s32 32, %v560
    %v562 = vshll.u32 %v553, %v560
    %v563 = vshrl.u32 %v545, %v561
    %v564 = vor.u32 %v562, %v563
    %v565 = vsub.s32 4294967266, %v560
    %v566 = vadd.s32 %v565, 127
    %v567 = vshll.u32 %v566, 23
    %v568 = vor.u32 4788187, %v567
    %v569 = vand.u32 2147483647, %v568
    %v571 = vcvt.s32.f32 %v564
    %v572 = vmul.f32 %v571, %v569
    %v573 = vxor.u32 %v572, 2147483648
    %v574 = vsel %vm491, %v573, %v572
    %v575 = vsub.s32 4, %v551
    %v576 = vsel %vm491, %v575, %v551
    %v577 = vsel %vm490, %v164, %v574
    %v578 = vsel %vm490, 0, %v576
    %v579 = vcosq.f32.pop %v577
    %v580 = vsinq.f32.pop %v577
    %vm581 = vweird.f32 %v164
    %v582 = vadd.s32 %v578, 3
    %v583 = vand.u32 %v582, 3
    %vm584 = vcmp.lt.s32.totalorder %v583, 2
    %vm585 = vcmp.eq.s32.totalorder %v583, 0
    %v586 = vxor.u32 %v580, 2147483648
    %v587 = vsel %vm585, %v579, %v586
    %vm588 = vcmp.eq.s32.totalorder %v583, 2
    %v589 = vxor.u32 %v579, 2147483648
    %v590 = vsel %vm588, %v589, %v580
    %v591 = vsel %vm584, %v587, %v590
    %v592 = vsel %vm581, nan, %v591
    %v593 = vand.u32 2147483647, %v165
    %vm594 = vcmp.le.f32.partialorder %v593, 0.7853982
    %vm595 = vcmp.lt.s32.totalorder %v165, 0
    %v596 = vand.u32 %v165, 2139095040
    %v597 = vshrl.u32 %v596, 23
    %v598 = vsub.s32 %v597, 127
    %v599 = vand.u32 2147483647, %v165
    %v600 = vand.u32 %v599, 8388607
    %v601 = vor.u32 %v600, 8388608
    %v602 = vsub.s32 0, %v601
    %v603 = vadd.s32 %v598, 1
    %vm604 = vcmp.gt.s32.totalorder %v603, 0
    %v605 = vsel %vm604, %v603, 0
    %v606 = vshrl.u32 %v605, 5
    %v607 = vand.u32 %v605, 31
    %v608 = vsub.s32 32, %v607
    %v609 = vshrl.u32 683565275, %v608
    %v610 = vshll.u32 683565275, %v607
    %v611 = vshrl.u32 2475754826, %v608
    %v612 = vor.u32 %v610, %v611
    %v613 = vshll.u32 2475754826, %v607
    %v614 = vshrl.u32 2131351028, %v608
    %v615 = vor.u32 %v613, %v614
    %v616 = vshll.u32 2131351028, %v607
    %v617 = vshrl.u32 2102212464, %v608
    %v618 = vor.u32 %v616, %v617
    %v619 = vshll.u32 2102212464, %v607
    %v620 = vshrl.u32 920167782, %v608
    %v621 = vor.u32 %v619, %v620
    %v622 = vshll.u32 920167782, %v607
    %v623 = vshrl.u32 1326507024, %v608
    %v624 = vor.u32 %v622, %v623
    %vm625 = vcmp.lt.s32.totalorder %v606, 1
    %vm626 = vcmp.lt.s32.totalorder %v606, 2
    %vm627 = vcmp.lt.s32.totalorder %v606, 3
    %vm628 = vcmp.lt.s32.totalorder %v606, 4
    %v629 = vsel %vm625, %v609, %v612
    %v630 = vsel %vm628, %v618, 2102212464
    %v631 = vsel %vm627, %v615, %v630
    %v632 = vsel %vm626, %v629, %v631
    %v633 = vsel %vm625, %v612, %v615
    %v634 = vsel %vm628, %v621, 920167782
    %v635 = vsel %vm627, %v618, %v634
    %v636 = vsel %vm626, %v633, %v635
    %v637 = vsel %vm625, %v615, %v618
    %v638 = vsel %vm628, %v624, 1326507024
    %v639 = vsel %vm627, %v621, %v638
    %v640 = vsel %vm626, %v637, %v639
    %v641 = vshll.u32 %v601, 8
    %v642 = vmul.u32.u64.compose %v641, %v640
    %v643 = vextract.low.u32 %v642
    %v644 = vextract.high.u32 %v642
    %v645 = vmul.u32.u64.compose %v641, %v636
    %v646 = vextract.low.u32 %v645
    %v647 = vextract.high.u32 %v645
    %v648 = vmul.u32 %v641, %v632
    %v649 = vadd.s32 %v644, %v646
    %vm650 = vc.u32 %v644, %v646
    %v651 = vadd.s32 %v647, 1
    %v652 = vsel %vm650, %v651, %v647
    %v653 = vadd.s32 %v648, %v652
    %v654 = vadd.s32 %v653, 536870912
    %v655 = vshrl.u32 %v654, 30
    %v656 = vshll.u32 %v655, 30
    %v657 = vsub.s32 %v653, %v656
    %vm658 = vcmp.lt.s32.totalorder %v657, 0
    %v659 = vsub.s32 0, %v657
    %v660 = vsel %vm658, %v659, %v657
    %v661 = vclz %v660
    %v662 = vsub.s32 %v661, 2
    %vm663 = vcmp.gt.s32.totalorder 0, %v662
    %v664 = vsel %vm663, 0, %v662
    %v665 = vsub.s32 32, %v664
    %v666 = vshll.u32 %v657, %v664
    %v667 = vshrl.u32 %v649, %v665
    %v668 = vor.u32 %v666, %v667
    %v669 = vsub.s32 4294967266, %v664
    %v670 = vadd.s32 %v669, 127
    %v671 = vshll.u32 %v670, 23
    %v672 = vor.u32 4788187, %v671
    %v673 = vand.u32 2147483647, %v672
    %v675 = vcvt.s32.f32 %v668
    %v676 = vmul.f32 %v675, %v673
    %v677 = vxor.u32 %v676, 2147483648
    %v678 = vsel %vm595, %v677, %v676
    %v679 = vsub.s32 4, %v655
    %v680 = vsel %vm595, %v679, %v655
    %v681 = vsel %vm594, %v165, %v678
    %v682 = vsel %vm594, 0, %v680
    %v683 = vcosq.f32.pop %v681
    %v684 = vsinq.f32.pop %v681
    %vm685 = vweird.f32 %v165
    %v686 = vadd.s32 %v682, 3
    %v687 = vand.u32 %v686, 3
    %vm688 = vcmp.lt.s32.totalorder %v687, 2
    %vm689 = vcmp.eq.s32.totalorder %v687, 0
    %v690 = vxor.u32 %v684, 2147483648
    %v691 = vsel %vm689, %v683, %v690
    %vm692 = vcmp.eq.s32.totalorder %v687, 2
    %v693 = vxor.u32 %v683, 2147483648
    %v694 = vsel %vm692, %v693, %v684
    %v695 = vsel %vm688, %v691, %v694
    %v696 = vsel %vm685, nan, %v695
    %v697 = vand.u32 2147483647, %v166
    %vm698 = vcmp.le.f32.partialorder %v697, 0.7853982
    %vm699 = vcmp.lt.s32.totalorder %v166, 0
    %v700 = vand.u32 %v166, 2139095040
    %v701 = vshrl.u32 %v700, 23
    %v702 = vsub.s32 %v701, 127
    %v703 = vand.u32 2147483647, %v166
    %v704 = vand.u32 %v703, 8388607
    %v705 = vor.u32 %v704, 8388608
    %v706 = vsub.s32 0, %v705
    %v707 = vadd.s32 %v702, 1
    %vm708 = vcmp.gt.s32.totalorder %v707, 0
    %v709 = vsel %vm708, %v707, 0
    %v710 = vshrl.u32 %v709, 5
    %v711 = vand.u32 %v709, 31
    %v712 = vsub.s32 32, %v711
    %v713 = vshrl.u32 683565275, %v712
    %v714 = vshll.u32 683565275, %v711
    %v715 = vshrl.u32 2475754826, %v712
    %v716 = vor.u32 %v714, %v715
    %v717 = vshll.u32 2475754826, %v711
    %v718 = vshrl.u32 2131351028, %v712
    %v719 = vor.u32 %v717, %v718
    %v720 = vshll.u32 2131351028, %v711
    %v721 = vshrl.u32 2102212464, %v712
    %v722 = vor.u32 %v720, %v721
    %v723 = vshll.u32 2102212464, %v711
    %v724 = vshrl.u32 920167782, %v712
    %v725 = vor.u32 %v723, %v724
    %v726 = vshll.u32 920167782, %v711
    %v727 = vshrl.u32 1326507024, %v712
    %v728 = vor.u32 %v726, %v727
    %vm729 = vcmp.lt.s32.totalorder %v710, 1
    %vm730 = vcmp.lt.s32.totalorder %v710, 2
    %vm731 = vcmp.lt.s32.totalorder %v710, 3
    %vm732 = vcmp.lt.s32.totalorder %v710, 4
    %v733 = vsel %vm729, %v713, %v716
    %v734 = vsel %vm732, %v722, 2102212464
    %v735 = vsel %vm731, %v719, %v734
    %v736 = vsel %vm730, %v733, %v735
    %v737 = vsel %vm729, %v716, %v719
    %v738 = vsel %vm732, %v725, 920167782
    %v739 = vsel %vm731, %v722, %v738
    %v740 = vsel %vm730, %v737, %v739
    %v741 = vsel %vm729, %v719, %v722
    %v742 = vsel %vm732, %v728, 1326507024
    %v743 = vsel %vm731, %v725, %v742
    %v744 = vsel %vm730, %v741, %v743
    %v745 = vshll.u32 %v705, 8
    %v746 = vmul.u32.u64.compose %v745, %v744
    %v747 = vextract.low.u32 %v746
    %v748 = vextract.high.u32 %v746
    %v749 = vmul.u32.u64.compose %v745, %v740
    %v750 = vextract.low.u32 %v749
    %v751 = vextract.high.u32 %v749
    %v752 = vmul.u32 %v745, %v736
    %v753 = vadd.s32 %v748, %v750
    %vm754 = vc.u32 %v748, %v750
    %v755 = vadd.s32 %v751, 1
    %v756 = vsel %vm754, %v755, %v751
    %v757 = vadd.s32 %v752, %v756
    %v758 = vadd.s32 %v757, 536870912
    %v759 = vshrl.u32 %v758, 30
    %v760 = vshll.u32 %v759, 30
    %v761 = vsub.s32 %v757, %v760
    %vm762 = vcmp.lt.s32.totalorder %v761, 0
    %v763 = vsub.s32 0, %v761
    %v764 = vsel %vm762, %v763, %v761
    %v765 = vclz %v764
    %v766 = vsub.s32 %v765, 2
    %vm767 = vcmp.gt.s32.totalorder 0, %v766
    %v768 = vsel %vm767, 0, %v766
    %v769 = vsub.s32 32, %v768
    %v770 = vshll.u32 %v761, %v768
    %v771 = vshrl.u32 %v753, %v769
    %v772 = vor.u32 %v770, %v771
    %v773 = vsub.s32 4294967266, %v768
    %v774 = vadd.s32 %v773, 127
    %v775 = vshll.u32 %v774, 23
    %v776 = vor.u32 4788187, %v775
    %v777 = vand.u32 2147483647, %v776
    %v779 = vcvt.s32.f32 %v772
    %v780 = vmul.f32 %v779, %v777
    %v781 = vxor.u32 %v780, 2147483648
    %v782 = vsel %vm699, %v781, %v780
    %v783 = vsub.s32 4, %v759
    %v784 = vsel %vm699, %v783, %v759
    %v785 = vsel %vm698, %v166, %v782
    %v786 = vsel %vm698, 0, %v784
    %v787 = vcosq.f32.pop %v785
    %v788 = vsinq.f32.pop %v785
    %vm789 = vweird.f32 %v166
    %v790 = vadd.s32 %v786, 3
    %v791 = vand.u32 %v790, 3
    %vm792 = vcmp.lt.s32.totalorder %v791, 2
    %vm793 = vcmp.eq.s32.totalorder %v791, 0
    %v794 = vxor.u32 %v788, 2147483648
    %v795 = vsel %vm793, %v787, %v794
    %vm796 = vcmp.eq.s32.totalorder %v791, 2
    %v797 = vxor.u32 %v787, 2147483648
    %v798 = vsel %vm796, %v797, %v788
    %v799 = vsel %vm792, %v795, %v798
    %v800 = vsel %vm789, nan, %v799
    %v801 = vand.u32 2147483647, %v167
    %vm802 = vcmp.le.f32.partialorder %v801, 0.7853982
    %vm803 = vcmp.lt.s32.totalorder %v167, 0
    %v804 = vand.u32 %v167, 2139095040
    %v805 = vshrl.u32 %v804, 23
    %v806 = vsub.s32 %v805, 127
    %v807 = vand.u32 2147483647, %v167
    %v808 = vand.u32 %v807, 8388607
    %v809 = vor.u32 %v808, 8388608
    %v810 = vsub.s32 0, %v809
    %v811 = vadd.s32 %v806, 1
    %vm812 = vcmp.gt.s32.totalorder %v811, 0
    %v813 = vsel %vm812, %v811, 0
    %v814 = vshrl.u32 %v813, 5
    %v815 = vand.u32 %v813, 31
    %v816 = vsub.s32 32, %v815
    %v817 = vshrl.u32 683565275, %v816
    %v818 = vshll.u32 683565275, %v815
    %v819 = vshrl.u32 2475754826, %v816
    %v820 = vor.u32 %v818, %v819
    %v821 = vshll.u32 2475754826, %v815
    %v822 = vshrl.u32 2131351028, %v816
    %v823 = vor.u32 %v821, %v822
    %v824 = vshll.u32 2131351028, %v815
    %v825 = vshrl.u32 2102212464, %v816
    %v826 = vor.u32 %v824, %v825
    %v827 = vshll.u32 2102212464, %v815
    %v828 = vshrl.u32 920167782, %v816
    %v829 = vor.u32 %v827, %v828
    %v830 = vshll.u32 920167782, %v815
    %v831 = vshrl.u32 1326507024, %v816
    %v832 = vor.u32 %v830, %v831
    %vm833 = vcmp.lt.s32.totalorder %v814, 1
    %vm834 = vcmp.lt.s32.totalorder %v814, 2
    %vm835 = vcmp.lt.s32.totalorder %v814, 3
    %vm836 = vcmp.lt.s32.totalorder %v814, 4
    %v837 = vsel %vm833, %v817, %v820
    %v838 = vsel %vm836, %v826, 2102212464
    %v839 = vsel %vm835, %v823, %v838
    %v840 = vsel %vm834, %v837, %v839
    %v841 = vsel %vm833, %v820, %v823
    %v842 = vsel %vm836, %v829, 920167782
    %v843 = vsel %vm835, %v826, %v842
    %v844 = vsel %vm834, %v841, %v843
    %v845 = vsel %vm833, %v823, %v826
    %v846 = vsel %vm836, %v832, 1326507024
    %v847 = vsel %vm835, %v829, %v846
    %v848 = vsel %vm834, %v845, %v847
    %v849 = vshll.u32 %v809, 8
    %v850 = vmul.u32.u64.compose %v849, %v848
    %v851 = vextract.low.u32 %v850
    %v852 = vextract.high.u32 %v850
    %v853 = vmul.u32.u64.compose %v849, %v844
    %v854 = vextract.low.u32 %v853
    %v855 = vextract.high.u32 %v853
    %v856 = vmul.u32 %v849, %v840
    %v857 = vadd.s32 %v852, %v854
    %vm858 = vc.u32 %v852, %v854
    %v859 = vadd.s32 %v855, 1
    %v860 = vsel %vm858, %v859, %v855
    %v861 = vadd.s32 %v856, %v860
    %v862 = vadd.s32 %v861, 536870912
    %v863 = vshrl.u32 %v862, 30
    %v864 = vshll.u32 %v863, 30
    %v865 = vsub.s32 %v861, %v864
    %vm866 = vcmp.lt.s32.totalorder %v865, 0
    %v867 = vsub.s32 0, %v865
    %v868 = vsel %vm866, %v867, %v865
    %v869 = vclz %v868
    %v870 = vsub.s32 %v869, 2
    %vm871 = vcmp.gt.s32.totalorder 0, %v870
    %v872 = vsel %vm871, 0, %v870
    %v873 = vsub.s32 32, %v872
    %v874 = vshll.u32 %v865, %v872
    %v875 = vshrl.u32 %v857, %v873
    %v876 = vor.u32 %v874, %v875
    %v877 = vsub.s32 4294967266, %v872
    %v878 = vadd.s32 %v877, 127
    %v879 = vshll.u32 %v878, 23
    %v880 = vor.u32 4788187, %v879
    %v881 = vand.u32 2147483647, %v880
    %v883 = vcvt.s32.f32 %v876
    %v884 = vmul.f32 %v883, %v881
    %v885 = vxor.u32 %v884, 2147483648
    %v886 = vsel %vm803, %v885, %v884
    %v887 = vsub.s32 4, %v863
    %v888 = vsel %vm803, %v887, %v863
    %v889 = vsel %vm802, %v167, %v886
    %v890 = vsel %vm802, 0, %v888
    %v891 = vcosq.f32.pop %v889
    %v892 = vsinq.f32.pop %v889
    %vm893 = vweird.f32 %v167
    %v894 = vadd.s32 %v890, 3
    %v895 = vand.u32 %v894, 3
    %vm896 = vcmp.lt.s32.totalorder %v895, 2
    %vm897 = vcmp.eq.s32.totalorder %v895, 0
    %v898 = vxor.u32 %v892, 2147483648
    %v899 = vsel %vm897, %v891, %v898
    %vm900 = vcmp.eq.s32.totalorder %v895, 2
    %v901 = vxor.u32 %v891, 2147483648
    %v902 = vsel %vm900, %v901, %v892
    %v903 = vsel %vm896, %v899, %v902
    %v904 = vsel %vm893, nan, %v903
    %v905 = vand.u32 2147483647, %v168
    %vm906 = vcmp.le.f32.partialorder %v905, 0.7853982
    %vm907 = vcmp.lt.s32.totalorder %v168, 0
    %v908 = vand.u32 %v168, 2139095040
    %v909 = vshrl.u32 %v908, 23
    %v910 = vsub.s32 %v909, 127
    %v911 = vand.u32 2147483647, %v168
    %v912 = vand.u32 %v911, 8388607
    %v913 = vor.u32 %v912, 8388608
    %v914 = vsub.s32 0, %v913
    %v915 = vadd.s32 %v910, 1
    %vm916 = vcmp.gt.s32.totalorder %v915, 0
    %v917 = vsel %vm916, %v915, 0
    %v918 = vshrl.u32 %v917, 5
    %v919 = vand.u32 %v917, 31
    %v920 = vsub.s32 32, %v919
    %v921 = vshrl.u32 683565275, %v920
    %v922 = vshll.u32 683565275, %v919
    %v923 = vshrl.u32 2475754826, %v920
    %v924 = vor.u32 %v922, %v923
    %v925 = vshll.u32 2475754826, %v919
    %v926 = vshrl.u32 2131351028, %v920
    %v927 = vor.u32 %v925, %v926
    %v928 = vshll.u32 2131351028, %v919
    %v929 = vshrl.u32 2102212464, %v920
    %v930 = vor.u32 %v928, %v929
    %v931 = vshll.u32 2102212464, %v919
    %v932 = vshrl.u32 920167782, %v920
    %v933 = vor.u32 %v931, %v932
    %v934 = vshll.u32 920167782, %v919
    %v935 = vshrl.u32 1326507024, %v920
    %v936 = vor.u32 %v934, %v935
    %vm937 = vcmp.lt.s32.totalorder %v918, 1
    %vm938 = vcmp.lt.s32.totalorder %v918, 2
    %vm939 = vcmp.lt.s32.totalorder %v918, 3
    %vm940 = vcmp.lt.s32.totalorder %v918, 4
    %v941 = vsel %vm937, %v921, %v924
    %v942 = vsel %vm940, %v930, 2102212464
    %v943 = vsel %vm939, %v927, %v942
    %v944 = vsel %vm938, %v941, %v943
    %v945 = vsel %vm937, %v924, %v927
    %v946 = vsel %vm940, %v933, 920167782
    %v947 = vsel %vm939, %v930, %v946
    %v948 = vsel %vm938, %v945, %v947
    %v949 = vsel %vm937, %v927, %v930
    %v950 = vsel %vm940, %v936, 1326507024
    %v951 = vsel %vm939, %v933, %v950
    %v952 = vsel %vm938, %v949, %v951
    %v953 = vshll.u32 %v913, 8
    %v954 = vmul.u32.u64.compose %v953, %v952
    %v955 = vextract.low.u32 %v954
    %v956 = vextract.high.u32 %v954
    %v957 = vmul.u32.u64.compose %v953, %v948
    %v958 = vextract.low.u32 %v957
    %v959 = vextract.high.u32 %v957
    %v960 = vmul.u32 %v953, %v944
    %v961 = vadd.s32 %v956, %v958
    %vm962 = vc.u32 %v956, %v958
    %v963 = vadd.s32 %v959, 1
    %v964 = vsel %vm962, %v963, %v959
    %v965 = vadd.s32 %v960, %v964
    %v966 = vadd.s32 %v965, 536870912
    %v967 = vshrl.u32 %v966, 30
    %v968 = vshll.u32 %v967, 30
    %v969 = vsub.s32 %v965, %v968
    %vm970 = vcmp.lt.s32.totalorder %v969, 0
    %v971 = vsub.s32 0, %v969
    %v972 = vsel %vm970, %v971, %v969
    %v973 = vclz %v972
    %v974 = vsub.s32 %v973, 2
    %vm975 = vcmp.gt.s32.totalorder 0, %v974
    %v976 = vsel %vm975, 0, %v974
    %v977 = vsub.s32 32, %v976
    %v978 = vshll.u32 %v969, %v976
    %v979 = vshrl.u32 %v961, %v977
    %v980 = vor.u32 %v978, %v979
    %v981 = vsub.s32 4294967266, %v976
    %v982 = vadd.s32 %v981, 127
    %v983 = vshll.u32 %v982, 23
    %v984 = vor.u32 4788187, %v983
    %v985 = vand.u32 2147483647, %v984
    %v987 = vcvt.s32.f32 %v980
    %v988 = vmul.f32 %v987, %v985
    %v989 = vxor.u32 %v988, 2147483648
    %v990 = vsel %vm907, %v989, %v988
    %v991 = vsub.s32 4, %v967
    %v992 = vsel %vm907, %v991, %v967
    %v993 = vsel %vm906, %v168, %v990
    %v994 = vsel %vm906, 0, %v992
    %v995 = vcosq.f32.pop %v993
    %v996 = vsinq.f32.pop %v993
    %vm997 = vweird.f32 %v168
    %v998 = vadd.s32 %v994, 3
    %v999 = vand.u32 %v998, 3
    %vm1000 = vcmp.lt.s32.totalorder %v999, 2
    %vm1001 = vcmp.eq.s32.totalorder %v999, 0
    %v1002 = vxor.u32 %v996, 2147483648
    %v1003 = vsel %vm1001, %v995, %v1002
    %vm1004 = vcmp.eq.s32.totalorder %v999, 2
    %v1005 = vxor.u32 %v995, 2147483648
    %v1006 = vsel %vm1004, %v1005, %v996
    %v1007 = vsel %vm1000, %v1003, %v1006
    %v1008 = vsel %vm997, nan, %v1007
    %v1009 = vadd.f32 %v169, %v280
    %v1010 = vadd.f32 %v170, %v384
    %v1011 = vadd.f32 %v171, %v488
    %v1012 = vadd.f32 %v172, %v592
    %v1013 = vadd.f32 %v173, %v696
    %v1014 = vadd.f32 %v174, %v800
    %v1015 = vadd.f32 %v175, %v904
    %v1016 = vadd.f32 %v176, %v1008
    %1017 = vst [vmem:[#allocation9] sm:$0xf] %v1009
    %1018 = vst [vmem:[#allocation9 + $0x4] sm:$0xf] %v1010
    %1019 = vst [vmem:[#allocation9 + $0x8] sm:$0xf] %v1011
    %1020 = vst [vmem:[#allocation9 + $0xc] sm:$0xf] %v1012
    %1021 = vst [vmem:[#allocation9 + $0x10] sm:$0xf] %v1013
    %1022 = vst [vmem:[#allocation9 + $0x14] sm:$0xf] %v1014
    %1023 = vst [vmem:[#allocation9 + $0x18] sm:$0xf] %v1015
    %1024 = vst [vmem:[#allocation9 + $0x1c] sm:$0xf] %v1016
    // Predicated region
    $region22: #{tpu_custom_call.1} parent=1 // pred_check
      _
    $region23: #{tpu_custom_call.1} parent=1 // pred_check_branch
      %1026 = sbr.rel (0) target = $region25
    $region24: #{tpu_custom_call.1} parent=1 // pred_region
      %s1027 = sadd.s32 0, 0
      %s1028 = smul.u32 8, %s1027
      %s1030 = ssub.s32 512, 512
      %1031 = vsyncadd [#allocation6], %s1030
      %s1032 = smul.addr %s1028, 64
      %s1033 = scalar_lea.hbm %s2, %s1032
      %s1034 = sshll.u32 [#allocation9], 4
      %s1035 = int_to_ptr.vmem [resolvable:$true] %s1034
      %1040 = dma.vmem_to_hbm [thread:$0]  %s1035, 512, %s1033, [#allocation6], 64, 64, 4
    $region25: #{tpu_custom_call.1} parent=1 // pred_fallthru
      _
    // Predicated region
    $region26: #{tpu_custom_call.1} parent=1 // pred_check
      _
    $region27: #{tpu_custom_call.1} parent=1 // pred_check_branch
      %1042 = sbr.rel (0) target = $region29
    $region28: #{tpu_custom_call.1} parent=1 // pred_region
      %1043 = dma.done [#allocation6], 512
    $region29: #{tpu_custom_call.1} parent=1 // pred_fallthru
      _
    %1044 = vsyncpa [#allocation5], 1
    %1045 = vsyncpa [#allocation8], 1
    %1046 = vsyncpa [#allocation6], 1

</llo_original>
